<compile_context>
chip_gen: v5e
topology: v5e:2x2
jax: 0.10.0
libtpu: 0.0.40
codegen_flags: <defaults>
</compile_context>

<pallas_src>
import math
from functools import partial

import jax
import jax.numpy as jnp
from jax import lax
from jax.experimental import pallas as pl
from jax.experimental.pallas import tpu as pltpu


def _round_up(x, m):
    return (x + m - 1) // m * m


# ----------------------------------------------------------------------------
# Pallas kernel: fused actor+critic MLPs + diagonal-Gaussian log-prob.
# Output slab layout (per row, W lanes): lanes [0..A-1]=action_mean, lane A=value,
# lanes >A = -0.5 * quadratic form (wrapper adds the hoisted Gaussian constant).
# ----------------------------------------------------------------------------
def ppo_eval_kernel(s_ref, a_ref, w1_ref, b1_ref, w2_ref, b2_ref, w3_ref, b3_ref,
                    ivar_ref, out_ref, *, action_dim):
    wdt = w2_ref.dtype
    s = s_ref[...]                                                     # (TB, S)

    # fused layer 1: [actor | critic] -> (TB, 256), both nets use tanh
    h = jnp.tanh(jnp.dot(s, w1_ref[...],
                         preferred_element_type=jnp.float32) + b1_ref[...])
    # block-diagonal layer 2: (TB,256)@(256,128) -> lanes 0..63 actor h2, 64..127 critic c2
    h = jnp.tanh(jnp.dot(h.astype(wdt), w2_ref[...],
                         preferred_element_type=jnp.float32) + b2_ref[...])
    # block-diagonal heads, only W output lanes:
    #   lanes 0..A-1 = actor pre-tanh mean, lane A = critic value, rest = 0
    raw = jnp.dot(h.astype(wdt), w3_ref[...],
                  preferred_element_type=jnp.float32) + b3_ref[...]    # (TB, W)
    mean_t = jnp.tanh(raw)

    # diagonal-Gaussian quadratic form (ivar is 0 on non-action lanes, so padded
    # lanes and the value lane drop out)
    diff = a_ref[...] - mean_t                                         # (TB, W)
    nhalf_quad = -0.5 * jnp.sum(diff * diff * ivar_ref[...], axis=-1, keepdims=True)

    lane = lax.broadcasted_iota(jnp.int32, raw.shape, 1)
    out_ref[...] = jnp.where(lane < action_dim, mean_t,               # tanh'd mean
                             jnp.where(lane == action_dim, raw,       # linear value
                                       nhalf_quad))                   # -0.5*quad


# ----------------------------------------------------------------------------
# Wrapper
# ----------------------------------------------------------------------------
def ppo_evaluate(s, a, params, action_var, *, tile_b=4096, matmul_dtype=jnp.float32):
    """Returns (action_logprobs [B], state_values [B,1], dist_entropy [B], action_mean [B,A])."""
    B, S = s.shape
    A = a.shape[1]
    f32 = jnp.float32
    W = max(8, _round_up(A + 2, 8))     # lane width for a / heads / output slab
    assert A + 1 < W

    (wa1, ba1, wa2, ba2, wa3, ba3,
     wc1, bc1, wc2, bc2, wc3, bc3) = params

    # ---- one-time weight packing (fused layer 1, block-diagonal layers 2/3) ----
    w1 = jnp.concatenate([wa1, wc1], axis=1).astype(f32)                     # (S, 256)
    b1 = jnp.concatenate([ba1, bc1]).reshape(1, 256).astype(f32)
    w2 = (jnp.zeros((256, 128), f32)
          .at[:128, :64].set(wa2).at[128:, 64:128].set(wc2))                 # (256, 128)
    b2 = jnp.zeros((1, 128), f32).at[0, :64].set(ba2).at[0, 64:128].set(bc2)
    w3 = (jnp.zeros((128, W), f32)
          .at[:64, :A].set(wa3).at[64:128, A:A + 1].set(wc3))                # (128, W)
    b3 = jnp.zeros((1, W), f32).at[0, :A].set(ba3).at[0, A].set(bc3[0])
    w1, w2, w3 = (w.astype(matmul_dtype) for w in (w1, w2, w3))

    # ---- Gaussian constants hoisted out of the kernel ----
    ivar = jnp.zeros((1, W), f32).at[0, :A].set(1.0 / action_var)
    log_det = jnp.sum(jnp.log(action_var))
    gconst = (-0.5 * (A * math.log(2.0 * math.pi) + log_det)).astype(f32)
    entropy_const = 0.5 * A * (1.0 + math.log(2.0 * math.pi)) + 0.5 * log_det

    # ---- batch tiling (big tile to amortize per-step overhead, >=2 steps for v7x) ----
    sub = 16 if jnp.dtype(matmul_dtype).itemsize < 4 else 8   # bf16 packs 16 sublanes
    b_al = _round_up(B, sub)
    TB = int(min(tile_b, b_al))
    if TB >= b_al and b_al >= 2 * sub:
        # would be a single grid step: split so the "parallel" axis feeds both v7x TCs
        TB = _round_up((b_al + 1) // 2, sub)
    Bp = _round_up(B, TB)

    s_in = s.astype(f32)
    if Bp != B:
        s_in = jnp.zeros((Bp, S), f32).at[:B].set(s_in)
    s_in = s_in.astype(matmul_dtype)
    a_in = jnp.zeros((Bp, W), f32).at[:B, :A].set(a.astype(f32))
    grid = (Bp // TB,)

    def const_spec(arr):
        return pl.BlockSpec(arr.shape, lambda i: (0,) * arr.ndim)

    in_specs = [
        pl.BlockSpec((TB, S), lambda i: (i, 0)),        # s: batch-tiled
        pl.BlockSpec((TB, W), lambda i: (i, 0)),        # a (narrow W-lane pad): batch-tiled
        const_spec(w1), const_spec(b1),
        const_spec(w2), const_spec(b2),
        const_spec(w3), const_spec(b3),
        const_spec(ivar),
    ]
    # NOTE: weight blocks are grid-invariant, so the pipeline DMAs them only once.
    # TODO(synk): pipeline_mode=pl.Buffered(1) on the weight specs would shave ~0.2 MB
    # of VMEM on v7x; omitted here for maximum compatibility.

    out = pl.pallas_call(
        partial(ppo_eval_kernel, action_dim=A),
        grid=grid,
        in_specs=in_specs,
        out_specs=pl.BlockSpec((TB, W), lambda i: (i, 0)),
        out_shape=jax.ShapeDtypeStruct((Bp, W), f32),
        compiler_params=pltpu.CompilerParams(
            dimension_semantics=("parallel",),
            vmem_limit_bytes=48 * 1024 * 1024,
        ),
    )(s_in, a_in, w1, b1, w2, b2, w3, b3, ivar)

    mean = out[:B, :A]
    vals = out[:B, A:A + 1]
    logp = out[:B, A + 1] + gconst             # fold hoisted Gaussian constant here
    ent = jnp.full((B,), entropy_const, f32)   # batch-independent constant
    return logp, vals, ent, mean


# ----------------------------------------------------------------------------
# Deterministic parameter initialization (mirrors nn.init.orthogonal_ shapes).
# ----------------------------------------------------------------------------
def orthogonal_init(key, in_dim, out_dim, gain):
    rows, cols = out_dim, in_dim                    # PyTorch weight shape (out, in)
    m = jax.random.normal(key, (max(rows, cols), min(rows, cols)), jnp.float32)
    q, r = jnp.linalg.qr(m)
    q = q * jnp.sign(jnp.diagonal(r))
    if rows < cols:
        q = q.T
    w_torch = gain * q[:rows, :cols]                # (out, in)
    return w_torch.T                                # stored as (in, out)


def make_params(key, state_dim, action_dim):
    ks = jax.random.split(key, 6)
    bias = lambda n: jnp.full((n,), 0.001, jnp.float32)
    wa1 = orthogonal_init(ks[0], state_dim, 128, gain=1.0)
    wa2 = orthogonal_init(ks[1], 128, 64, gain=1.0)
    wa3 = orthogonal_init(ks[2], 64, action_dim, gain=0.01)
    wc1 = orthogonal_init(ks[3], state_dim, 128, gain=1.0)
    wc2 = orthogonal_init(ks[4], 128, 64, gain=1.0)
    wc3 = orthogonal_init(ks[5], 64, 1, gain=1.0)
    return (wa1, bias(128), wa2, bias(64), wa3, bias(action_dim),
            wc1, bias(128), wc2, bias(64), wc3, bias(1))


# ----------------------------------------------------------------------------
# Pure-JAX reference for correctness check.
# ----------------------------------------------------------------------------
def reference_evaluate(s, a, params, action_var):
    (wa1, ba1, wa2, ba2, wa3, ba3,
     wc1, bc1, wc2, bc2, wc3, bc3) = params
    h = jnp.tanh(s @ wa1 + ba1)
    h = jnp.tanh(h @ wa2 + ba2)
    mean = jnp.tanh(h @ wa3 + ba3)
    c = jnp.tanh(s @ wc1 + bc1)
    c = jnp.tanh(c @ wc2 + bc2)
    vals = c @ wc3 + bc3
    D = a.shape[-1]
    log_det = jnp.sum(jnp.log(action_var))
    diff = a - mean
    logp = -0.5 * (jnp.sum(diff * diff / action_var, -1)
                   + D * math.log(2 * math.pi) + log_det)
    ent = jnp.full((s.shape[0],), 0.5 * D * (1 + math.log(2 * math.pi)) + 0.5 * log_det)
    return logp, vals, ent, mean


if __name__ == "__main__":
    B, STATE_DIM, ACTION_DIM = 8, 12, 4
    ACTION_STD_INIT = 0.5

    key = jax.random.PRNGKey(0)
    k_param, k_s, k_a = jax.random.split(key, 3)

    params = make_params(k_param, STATE_DIM, ACTION_DIM)
    action_var = jnp.full((ACTION_DIM,), ACTION_STD_INIT ** 2, jnp.float32)

    s = jax.random.normal(k_s, (B, STATE_DIM), jnp.float32)
    a = jax.random.normal(k_a, (B, ACTION_DIM), jnp.float32) * ACTION_STD_INIT

    # ---- f32 path (tight tolerance vs reference) ----
    logp, vals, ent, mean = ppo_evaluate(s, a, params, action_var)
    jax.block_until_ready((logp, vals, ent, mean))

    r_logp, r_vals, r_ent, r_mean = reference_evaluate(s, a, params, action_var)
    assert jnp.allclose(mean, r_mean, atol=2e-4), "mean mismatch"
    assert jnp.allclose(vals, r_vals, atol=2e-4), "value mismatch"
    assert jnp.allclose(logp, r_logp, atol=2e-4), "logprob mismatch"
    assert jnp.allclose(ent, r_ent, atol=2e-4), "entropy mismatch"

    # ---- bf16 matmul-operand path (DMA + MXU-rate win on v6e/v7x; elementwise
    #      math stays f32 so it is also v5e-safe). Looser tolerances, as expected. ----
    logp_b, vals_b, ent_b, mean_b = ppo_evaluate(
        s, a, params, action_var, matmul_dtype=jnp.bfloat16)
    jax.block_until_ready((logp_b, vals_b, ent_b, mean_b))
    assert jnp.allclose(mean_b, r_mean, atol=3e-2), "bf16 mean mismatch"
    assert jnp.allclose(vals_b, r_vals, atol=3e-2), "bf16 value mismatch"
    assert jnp.allclose(logp_b, r_logp, atol=3e-1), "bf16 logprob mismatch"

    print("KERNEL_OK")
</pallas_src>

<mosaic_0001>
module attributes {stable_mosaic.version = 11 : i64} {
  func.func @ppo_eval_kernel(%arg0: i32, %arg1: memref<8x12xf32, #tpu.memory_space<vmem>>, %arg2: memref<8x8xf32, #tpu.memory_space<vmem>>, %arg3: memref<12x256xf32, #tpu.memory_space<vmem>>, %arg4: memref<1x256xf32, #tpu.memory_space<vmem>>, %arg5: memref<256x128xf32, #tpu.memory_space<vmem>>, %arg6: memref<1x128xf32, #tpu.memory_space<vmem>>, %arg7: memref<128x8xf32, #tpu.memory_space<vmem>>, %arg8: memref<1x8xf32, #tpu.memory_space<vmem>>, %arg9: memref<1x8xf32, #tpu.memory_space<vmem>>, %arg10: memref<8x8xf32, #tpu.memory_space<vmem>>) attributes {dimension_semantics = [#tpu.dimension_semantics<parallel>], iteration_bounds = array<i64: 1>, scalar_prefetch = 0 : i64, scratch_operands = 0 : i64, tpu.core_type = #tpu.core_type<tc>, window_params = [{transform_indices = @transform_0, window_bounds = array<i64: 8, 12>}, {transform_indices = @transform_1, window_bounds = array<i64: 8, 8>}, {pipeline_mode = #tpu.pipeline_mode<synchronous>, transform_indices = @transform_2, window_bounds = array<i64: 12, 256>}, {pipeline_mode = #tpu.pipeline_mode<synchronous>, transform_indices = @transform_3, window_bounds = array<i64: 1, 256>}, {pipeline_mode = #tpu.pipeline_mode<synchronous>, transform_indices = @transform_4, window_bounds = array<i64: 256, 128>}, {pipeline_mode = #tpu.pipeline_mode<synchronous>, transform_indices = @transform_5, window_bounds = array<i64: 1, 128>}, {pipeline_mode = #tpu.pipeline_mode<synchronous>, transform_indices = @transform_6, window_bounds = array<i64: 128, 8>}, {pipeline_mode = #tpu.pipeline_mode<synchronous>, transform_indices = @transform_7, window_bounds = array<i64: 1, 8>}, {pipeline_mode = #tpu.pipeline_mode<synchronous>, transform_indices = @transform_8, window_bounds = array<i64: 1, 8>}, {transform_indices = @transform_9, window_bounds = array<i64: 8, 8>}]} {
    %c0 = arith.constant 0 : index
    %c0_0 = arith.constant 0 : index
    %0 = vector.load %arg1[%c0, %c0_0] : memref<8x12xf32, #tpu.memory_space<vmem>>, vector<8x12xf32>
    %c0_1 = arith.constant 0 : index
    %c0_2 = arith.constant 0 : index
    %1 = vector.load %arg3[%c0_1, %c0_2] : memref<12x256xf32, #tpu.memory_space<vmem>>, vector<12x256xf32>
    %cst = arith.constant dense<0.000000e+00> : vector<8x256xf32>
    %2 = tpu.matmul %0, %1, %cst {dimension_numbers = #tpu.dot_dimension_numbers<[1], [0], [0], [1], [0, 0, 1, 1], [], []>} : vector<8x12xf32>, vector<12x256xf32>, vector<8x256xf32> -> vector<8x256xf32>
    %c0_3 = arith.constant 0 : index
    %c0_4 = arith.constant 0 : index
    %3 = vector.load %arg4[%c0_3, %c0_4] : memref<1x256xf32, #tpu.memory_space<vmem>>, vector<1x256xf32>
    %4 = vector.broadcast %3 : vector<1x256xf32> to vector<8x256xf32>
    %5 = arith.addf %2, %4 : vector<8x256xf32>
    %6 = math.tanh %5 : vector<8x256xf32>
    %c0_5 = arith.constant 0 : index
    %c0_6 = arith.constant 0 : index
    %7 = vector.load %arg5[%c0_5, %c0_6] : memref<256x128xf32, #tpu.memory_space<vmem>>, vector<256x128xf32>
    %cst_7 = arith.constant dense<0.000000e+00> : vector<8x128xf32>
    %8 = tpu.matmul %6, %7, %cst_7 {dimension_numbers = #tpu.dot_dimension_numbers<[1], [0], [0], [1], [0, 0, 1, 1], [], []>} : vector<8x256xf32>, vector<256x128xf32>, vector<8x128xf32> -> vector<8x128xf32>
    %c0_8 = arith.constant 0 : index
    %c0_9 = arith.constant 0 : index
    %9 = vector.load %arg6[%c0_8, %c0_9] : memref<1x128xf32, #tpu.memory_space<vmem>>, vector<1x128xf32>
    %10 = vector.broadcast %9 : vector<1x128xf32> to vector<8x128xf32>
    %11 = arith.addf %8, %10 : vector<8x128xf32>
    %12 = math.tanh %11 : vector<8x128xf32>
    %c0_10 = arith.constant 0 : index
    %c0_11 = arith.constant 0 : index
    %13 = vector.load %arg7[%c0_10, %c0_11] : memref<128x8xf32, #tpu.memory_space<vmem>>, vector<128x8xf32>
    %cst_12 = arith.constant dense<0.000000e+00> : vector<8x8xf32>
    %14 = tpu.matmul %12, %13, %cst_12 {dimension_numbers = #tpu.dot_dimension_numbers<[1], [0], [0], [1], [0, 0, 1, 1], [], []>} : vector<8x128xf32>, vector<128x8xf32>, vector<8x8xf32> -> vector<8x8xf32>
    %c0_13 = arith.constant 0 : index
    %c0_14 = arith.constant 0 : index
    %15 = vector.load %arg8[%c0_13, %c0_14] : memref<1x8xf32, #tpu.memory_space<vmem>>, vector<1x8xf32>
    %16 = vector.broadcast %15 : vector<1x8xf32> to vector<8x8xf32>
    %17 = arith.addf %14, %16 : vector<8x8xf32>
    %18 = math.tanh %17 : vector<8x8xf32>
    %c0_15 = arith.constant 0 : index
    %c0_16 = arith.constant 0 : index
    %19 = vector.load %arg2[%c0_15, %c0_16] : memref<8x8xf32, #tpu.memory_space<vmem>>, vector<8x8xf32>
    %20 = arith.subf %19, %18 : vector<8x8xf32>
    %21 = arith.mulf %20, %20 : vector<8x8xf32>
    %c0_17 = arith.constant 0 : index
    %c0_18 = arith.constant 0 : index
    %22 = vector.load %arg9[%c0_17, %c0_18] : memref<1x8xf32, #tpu.memory_space<vmem>>, vector<1x8xf32>
    %23 = vector.broadcast %22 : vector<1x8xf32> to vector<8x8xf32>
    %24 = arith.mulf %21, %23 : vector<8x8xf32>
    %cst_19 = arith.constant dense<0.000000e+00> : vector<8xf32>
    %25 = vector.multi_reduction <add>, %24, %cst_19 [1] : vector<8x8xf32> to vector<8xf32>
    %26 = vector.shape_cast %25 : vector<8xf32> to vector<8x1xf32>
    %cst_20 = arith.constant -5.000000e-01 : f32
    %27 = vector.broadcast %cst_20 : f32 to vector<8x1xf32>
    %28 = arith.mulf %27, %26 : vector<8x1xf32>
    %29 = tpu.iota {dimensions = array<i32: 1>} : vector<8x8xi32>
    %c4_i32 = arith.constant 4 : i32
    %30 = vector.broadcast %c4_i32 : i32 to vector<8x8xi32>
    %31 = arith.cmpi slt, %29, %30 : vector<8x8xi32>
    %c4_i32_21 = arith.constant 4 : i32
    %32 = vector.broadcast %c4_i32_21 : i32 to vector<8x8xi32>
    %33 = arith.cmpi eq, %29, %32 : vector<8x8xi32>
    %34 = vector.shape_cast %28 : vector<8x1xf32> to vector<8x1xf32>
    %35 = vector.broadcast %34 : vector<8x1xf32> to vector<8x8xf32>
    %36 = arith.select %33, %17, %35 : vector<8x8xi1>, vector<8x8xf32>
    %37 = arith.select %31, %18, %36 : vector<8x8xi1>, vector<8x8xf32>
    %c0_22 = arith.constant 0 : index
    %c0_23 = arith.constant 0 : index
    %38 = vector.load %arg10[%c0_22, %c0_23] : memref<8x8xf32, #tpu.memory_space<vmem>>, vector<8x8xf32>
    tpu.vector_store %arg10[%c0_22, %c0_23], %37 {strides = array<i32>} : memref<8x8xf32, #tpu.memory_space<vmem>>, vector<8x8xf32>,
    return
  }
  func.func @transform_0(%arg0: i32) -> (i32, i32) {
    %c0_i32 = arith.constant 0 : i32
    %c0_i32_0 = arith.constant 0 : i32
    return %arg0, %c0_i32 : i32, i32
  }
  func.func @transform_1(%arg0: i32) -> (i32, i32) {
    %c0_i32 = arith.constant 0 : i32
    %c0_i32_0 = arith.constant 0 : i32
    return %arg0, %c0_i32 : i32, i32
  }
  func.func @transform_2(%arg0: i32) -> (i32, i32) {
    %c0_i32 = arith.constant 0 : i32
    %c0_i32_0 = arith.constant 0 : i32
    %c0_i32_1 = arith.constant 0 : i32
    return %c0_i32, %c0_i32_0 : i32, i32
  }
  func.func @transform_3(%arg0: i32) -> (i32, i32) {
    %c0_i32 = arith.constant 0 : i32
    %c0_i32_0 = arith.constant 0 : i32
    %c0_i32_1 = arith.constant 0 : i32
    return %c0_i32, %c0_i32_0 : i32, i32
  }
  func.func @transform_4(%arg0: i32) -> (i32, i32) {
    %c0_i32 = arith.constant 0 : i32
    %c0_i32_0 = arith.constant 0 : i32
    %c0_i32_1 = arith.constant 0 : i32
    return %c0_i32, %c0_i32_0 : i32, i32
  }
  func.func @transform_5(%arg0: i32) -> (i32, i32) {
    %c0_i32 = arith.constant 0 : i32
    %c0_i32_0 = arith.constant 0 : i32
    %c0_i32_1 = arith.constant 0 : i32
    return %c0_i32, %c0_i32_0 : i32, i32
  }
  func.func @transform_6(%arg0: i32) -> (i32, i32) {
    %c0_i32 = arith.constant 0 : i32
    %c0_i32_0 = arith.constant 0 : i32
    %c0_i32_1 = arith.constant 0 : i32
    return %c0_i32, %c0_i32_0 : i32, i32
  }
  func.func @transform_7(%arg0: i32) -> (i32, i32) {
    %c0_i32 = arith.constant 0 : i32
    %c0_i32_0 = arith.constant 0 : i32
    %c0_i32_1 = arith.constant 0 : i32
    return %c0_i32, %c0_i32_0 : i32, i32
  }
  func.func @transform_8(%arg0: i32) -> (i32, i32) {
    %c0_i32 = arith.constant 0 : i32
    %c0_i32_0 = arith.constant 0 : i32
    %c0_i32_1 = arith.constant 0 : i32
    return %c0_i32, %c0_i32_0 : i32, i32
  }
  func.func @transform_9(%arg0: i32) -> (i32, i32) {
    %c0_i32 = arith.constant 0 : i32
    %c0_i32_0 = arith.constant 0 : i32
    return %arg0, %c0_i32 : i32, i32
  }
}

</mosaic_0001>

<llo_original>
// kernel: tpu_custom_call.1
$region0: #{tpu_custom_call.1}
  #allocation0 [shape = 'u32[]', space=smem, size = 0x4, offset = 0x4, fixed_abs, tag = 'smem constant byte address 0x4 - core index']
  #allocation1 [shape = 'u32[72,128]{1,0:T(1,128)}', space=vmem, size = 0x9000, scoped, tag = 'internal scratch']
  %s0 = inlined_call_operand.vmem [shape: f32[8,12], index: 0, kind: input, shape index: {}]
  %s1 = inlined_call_operand.vmem [shape: f32[8,8], index: 1, kind: input, shape index: {}]
  %s2 = inlined_call_operand.vmem [shape: f32[12,256], index: 2, kind: input, shape index: {}]
  %s3 = inlined_call_operand.vmem [shape: f32[1,256], index: 3, kind: input, shape index: {}]
  %s4 = inlined_call_operand.hbm [shape: f32[256,128], index: 4, kind: input, shape index: {}]
  %s5 = inlined_call_operand.vmem [shape: f32[1,128], index: 5, kind: input, shape index: {}]
  %s6 = inlined_call_operand.vmem [shape: f32[128,8], index: 6, kind: input, shape index: {}]
  %s7 = inlined_call_operand.vmem [shape: f32[1,8], index: 7, kind: input, shape index: {}]
  %s8 = inlined_call_operand.vmem [shape: f32[1,8], index: 8, kind: input, shape index: {}]
  %s9 = inlined_call_operand.hbm [shape: f32[8,8], index: 9, kind: output, shape index: {}]
  %s10 = sld [smem:[#allocation0]]
  $region50: #{tpu_custom_call.1} parent=0
    _
  %s12 = ssub.s32 1, %s10
  %s13 = scalar_select 0, %s12, %s10
  $region1: #{tpu_custom_call.1} parent=0
    #allocation2 [shape = 'u8[131072]{0}', space=vmem, size = 0x20000, scoped, tag = 'input window, operand 4, single buffered']
    #allocation3 [shape = 's32[1]{0}', space=sflag, size = 0x4, scoped, tag = 'scoped memory for tpu_custom_call.1']
    #allocation4 [shape = 's32[1]{0}', space=sflag, size = 0x4, scoped, tag = 'scoped memory for tpu_custom_call.1']
    #allocation5 [shape = 'u8[4096]{0}', space=vmem, size = 0x1000, scoped, tag = 'output window, operand 0, single buffered']
    %14 = vsyncpa [#allocation3], 0
    %15 = vsyncpa [#allocation4], 0
    // Predicated region
    $region2: #{tpu_custom_call.1} parent=1 // pred_check
      _
    $region3: #{tpu_custom_call.1} parent=1 // pred_check_branch
      %17 = sbr.rel (0) target = $region5
    $region4: #{tpu_custom_call.1} parent=1 // pred_region
      _
    $region5: #{tpu_custom_call.1} parent=1 // pred_fallthru
      _
    // Predicated region
    $region6: #{tpu_custom_call.1} parent=1 // pred_check
      _
    $region7: #{tpu_custom_call.1} parent=1 // pred_check_branch
      %19 = sbr.rel (0) target = $region9
    $region8: #{tpu_custom_call.1} parent=1 // pred_region
      _
    $region9: #{tpu_custom_call.1} parent=1 // pred_fallthru
      _
    // Predicated region
    $region10: #{tpu_custom_call.1} parent=1 // pred_check
      _
    $region11: #{tpu_custom_call.1} parent=1 // pred_check_branch
      %21 = sbr.rel (0) target = $region13
    $region12: #{tpu_custom_call.1} parent=1 // pred_region
      _
    $region13: #{tpu_custom_call.1} parent=1 // pred_fallthru
      _
    // Predicated region
    $region14: #{tpu_custom_call.1} parent=1 // pred_check
      _
    $region15: #{tpu_custom_call.1} parent=1 // pred_check_branch
      %23 = sbr.rel (0) target = $region17
    $region16: #{tpu_custom_call.1} parent=1 // pred_region
      _
    $region17: #{tpu_custom_call.1} parent=1 // pred_fallthru
      _
    // Predicated region
    $region18: #{tpu_custom_call.1} parent=1 // pred_check
      _
    $region19: #{tpu_custom_call.1} parent=1 // pred_check_branch
      %25 = sbr.rel (0) target = $region21
    $region20: #{tpu_custom_call.1} parent=1 // pred_region
      %27 = vsyncadd [#allocation3], 0
      %s28 = sshll.u32 %s4, 4
      %s29 = int_to_ptr.hbm [resolvable:$true] %s28
      %s30 = sshll.u32 [#allocation2], 4
      %s31 = int_to_ptr.vmem [resolvable:$true] %s30
      %36 = dma.hbm_to_vmem [thread:$0]  %s29, 4096, %s31, [#allocation3], 128, 128, 8
    $region21: #{tpu_custom_call.1} parent=1 // pred_fallthru
      _
    // Predicated region
    $region22: #{tpu_custom_call.1} parent=1 // pred_check
      _
    $region23: #{tpu_custom_call.1} parent=1 // pred_check_branch
      %38 = sbr.rel (0) target = $region25
    $region24: #{tpu_custom_call.1} parent=1 // pred_region
      _
    $region25: #{tpu_custom_call.1} parent=1 // pred_fallthru
      _
    // Predicated region
    $region26: #{tpu_custom_call.1} parent=1 // pred_check
      _
    $region27: #{tpu_custom_call.1} parent=1 // pred_check_branch
      %40 = sbr.rel (0) target = $region29
    $region28: #{tpu_custom_call.1} parent=1 // pred_region
      _
    $region29: #{tpu_custom_call.1} parent=1 // pred_fallthru
      _
    // Predicated region
    $region30: #{tpu_custom_call.1} parent=1 // pred_check
      _
    $region31: #{tpu_custom_call.1} parent=1 // pred_check_branch
      %42 = sbr.rel (0) target = $region33
    $region32: #{tpu_custom_call.1} parent=1 // pred_region
      _
    $region33: #{tpu_custom_call.1} parent=1 // pred_fallthru
      _
    // Predicated region
    $region34: #{tpu_custom_call.1} parent=1 // pred_check
      _
    $region35: #{tpu_custom_call.1} parent=1 // pred_check_branch
      %44 = sbr.rel (0) target = $region37
    $region36: #{tpu_custom_call.1} parent=1 // pred_region
      _
    $region37: #{tpu_custom_call.1} parent=1 // pred_fallthru
      _
    // Predicated region
    $region38: #{tpu_custom_call.1} parent=1 // pred_check
      _
    $region39: #{tpu_custom_call.1} parent=1 // pred_check_branch
      %46 = sbr.rel (0) target = $region41
    $region40: #{tpu_custom_call.1} parent=1 // pred_region
      %48 = dma.done [#allocation3], 4096
    $region41: #{tpu_custom_call.1} parent=1 // pred_fallthru
      _
    %v49 = vld [vmem:[%s0] sm:$0xff]
    %v50 = vld [vmem:[%s2] sm:$0xff]
    %v51 = vld [vmem:[%s2 + $0x8] sm:$0xff]
    %v52 = vld [vmem:[%s2 + $0x10] sm:$0xf]
    %v53 = vld [vmem:[%s2 + $0x18] sm:$0xf]
    %v54 = vld [vmem:[%s3] sm:$0x3]
    %v56 = vperm.slane %v54, 0
    %v57 = vperm.slane %v54, 1
    %vm60 = vcmask 97280
    %v62 = vsel %vm60, %v49, 0
    %vm64 = vcmask 1043456
    %v66 = vsel %vm64, %v52, 0
    %v69 = vsel %vm64, %v53, 0
    %71 = vmatpush.msra.mxu0 0.0
    %72 = vmatpush.msra.mxu0 0.0
    %73 = vmatpush.msra.mxu0 0.0
    %74 = vmatpush.msra.mxu0 0.0
    %75 = vmatpush.msra.mxu0 0.0
    %76 = vmatpush.msra.mxu0 0.0
    %77 = vmatpush.msra.mxu0 0.0
    %78 = vmatpush.msra.mxu0 0.0
    %79 = vmatpush.msra.mxu0 0.0
    %80 = vmatpush.msra.mxu0 0.0
    %81 = vmatpush.msra.mxu0 0.0
    %82 = vmatpush.msra.mxu0 0.0
    %83 = vmatpush.msra.mxu0 0.0
    %84 = vmatpush.msra.mxu0 0.0
    %85 = vmatpush.msra.mxu0 %v66
    %86 = vmatpush.msra.mxu0 %v50
    %87 = vmatmul.f32.gmra.mxu0 %v62
    %v88 = vpop.f32.mrf.mxu0
    %v89 = vadd.f32 %v56, %v88
    %90 = vdwg.mxu0
    %91 = vmatpush.msra.mxu0 0.0
    %92 = vmatpush.msra.mxu0 0.0
    %93 = vmatpush.msra.mxu0 0.0
    %94 = vmatpush.msra.mxu0 0.0
    %95 = vmatpush.msra.mxu0 0.0
    %96 = vmatpush.msra.mxu0 0.0
    %97 = vmatpush.msra.mxu0 0.0
    %98 = vmatpush.msra.mxu0 0.0
    %99 = vmatpush.msra.mxu0 0.0
    %100 = vmatpush.msra.mxu0 0.0
    %101 = vmatpush.msra.mxu0 0.0
    %102 = vmatpush.msra.mxu0 0.0
    %103 = vmatpush.msra.mxu0 0.0
    %104 = vmatpush.msra.mxu0 0.0
    %105 = vmatpush.msra.mxu0 %v69
    %106 = vmatpush.msra.mxu0 %v51
    %107 = vmatmul.f32.gmra.mxu0 %v62
    %v108 = vpop.f32.mrf.mxu0
    %v109 = vadd.f32 %v57, %v108
    %110 = vdwg.mxu0
    %v111 = vtanh.pop %v89
    %v112 = vtanh.pop %v109
    %v113 = vld [vmem:[#allocation2] sm:$0xff]
    %v114 = vld [vmem:[#allocation2 + $0x8] sm:$0xff]
    %v115 = vld [vmem:[#allocation2 + $0x10] sm:$0xff]
    %v116 = vld [vmem:[#allocation2 + $0x18] sm:$0xff]
    %v117 = vld [vmem:[#allocation2 + $0x20] sm:$0xff]
    %v118 = vld [vmem:[#allocation2 + $0x28] sm:$0xff]
    %v119 = vld [vmem:[#allocation2 + $0x30] sm:$0xff]
    %v120 = vld [vmem:[#allocation2 + $0x38] sm:$0xff]
    %v121 = vld [vmem:[#allocation2 + $0x40] sm:$0xff]
    %v122 = vld [vmem:[#allocation2 + $0x48] sm:$0xff]
    %v123 = vld [vmem:[#allocation2 + $0x50] sm:$0xff]
    %v124 = vld [vmem:[#allocation2 + $0x58] sm:$0xff]
    %v125 = vld [vmem:[#allocation2 + $0x60] sm:$0xff]
    %v126 = vld [vmem:[#allocation2 + $0x68] sm:$0xff]
    %v127 = vld [vmem:[#allocation2 + $0x70] sm:$0xff]
    %v128 = vld [vmem:[#allocation2 + $0x78] sm:$0xff]
    %v129 = vld [vmem:[#allocation2 + $0x80] sm:$0xff]
    %v130 = vld [vmem:[#allocation2 + $0x88] sm:$0xff]
    %v131 = vld [vmem:[#allocation2 + $0x90] sm:$0xff]
    %v132 = vld [vmem:[#allocation2 + $0x98] sm:$0xff]
    %v133 = vld [vmem:[#allocation2 + $0xa0] sm:$0xff]
    %v134 = vld [vmem:[#allocation2 + $0xa8] sm:$0xff]
    %v135 = vld [vmem:[#allocation2 + $0xb0] sm:$0xff]
    %v136 = vld [vmem:[#allocation2 + $0xb8] sm:$0xff]
    %v137 = vld [vmem:[#allocation2 + $0xc0] sm:$0xff]
    %v138 = vld [vmem:[#allocation2 + $0xc8] sm:$0xff]
    %v139 = vld [vmem:[#allocation2 + $0xd0] sm:$0xff]
    %v140 = vld [vmem:[#allocation2 + $0xd8] sm:$0xff]
    %v141 = vld [vmem:[#allocation2 + $0xe0] sm:$0xff]
    %v142 = vld [vmem:[#allocation2 + $0xe8] sm:$0xff]
    %v143 = vld [vmem:[#allocation2 + $0xf0] sm:$0xff]
    %v144 = vld [vmem:[#allocation2 + $0xf8] sm:$0xff]
    %v145 = vld [vmem:[%s5] sm:$0x1]
    %v147 = vperm.slane %v145, 0
    %149 = vmatpush.msra.mxu0 %v128
    %150 = vmatpush.msra.mxu0 %v127
    %151 = vmatpush.msra.mxu0 %v126
    %152 = vmatpush.msra.mxu0 %v125
    %153 = vmatpush.msra.mxu0 %v124
    %154 = vmatpush.msra.mxu0 %v123
    %155 = vmatpush.msra.mxu0 %v122
    %156 = vmatpush.msra.mxu0 %v121
    %157 = vmatpush.msra.mxu0 %v120
    %158 = vmatpush.msra.mxu0 %v119
    %159 = vmatpush.msra.mxu0 %v118
    %160 = vmatpush.msra.mxu0 %v117
    %161 = vmatpush.msra.mxu0 %v116
    %162 = vmatpush.msra.mxu0 %v115
    %163 = vmatpush.msra.mxu0 %v114
    %164 = vmatpush.msra.mxu0 %v113
    %165 = vmatmul.f32.gmra.mxu0 %v111
    %v166 = vpop.f32.mrf.mxu0
    %v167 = vadd.f32 %v147, %v166
    %168 = vdwg.mxu0
    %169 = vmatpush.msra.mxu0 %v144
    %170 = vmatpush.msra.mxu0 %v143
    %171 = vmatpush.msra.mxu0 %v142
    %172 = vmatpush.msra.mxu0 %v141
    %173 = vmatpush.msra.mxu0 %v140
    %174 = vmatpush.msra.mxu0 %v139
    %175 = vmatpush.msra.mxu0 %v138
    %176 = vmatpush.msra.mxu0 %v137
    %177 = vmatpush.msra.mxu0 %v136
    %178 = vmatpush.msra.mxu0 %v135
    %179 = vmatpush.msra.mxu0 %v134
    %180 = vmatpush.msra.mxu0 %v133
    %181 = vmatpush.msra.mxu0 %v132
    %182 = vmatpush.msra.mxu0 %v131
    %183 = vmatpush.msra.mxu0 %v130
    %184 = vmatpush.msra.mxu0 %v129
    %185 = vmatmul.f32.gmra.mxu0 %v112
    %v186 = vpop.f32.mrf.mxu0
    %v187 = vadd.f32 %v167, %v186
    %188 = vdwg.mxu0
    %v189 = vtanh.pop %v187
    %v190 = vld [vmem:[%s6] sm:$0xff]
    %v191 = vld [vmem:[%s6 + $0x8] sm:$0xff]
    %v192 = vld [vmem:[%s6 + $0x10] sm:$0xff]
    %v193 = vld [vmem:[%s6 + $0x18] sm:$0xff]
    %v194 = vld [vmem:[%s6 + $0x20] sm:$0xff]
    %v195 = vld [vmem:[%s6 + $0x28] sm:$0xff]
    %v196 = vld [vmem:[%s6 + $0x30] sm:$0xff]
    %v197 = vld [vmem:[%s6 + $0x38] sm:$0xff]
    %v198 = vld [vmem:[%s6 + $0x40] sm:$0xff]
    %v199 = vld [vmem:[%s6 + $0x48] sm:$0xff]
    %v200 = vld [vmem:[%s6 + $0x50] sm:$0xff]
    %v201 = vld [vmem:[%s6 + $0x58] sm:$0xff]
    %v202 = vld [vmem:[%s6 + $0x60] sm:$0xff]
    %v203 = vld [vmem:[%s6 + $0x68] sm:$0xff]
    %v204 = vld [vmem:[%s6 + $0x70] sm:$0xff]
    %v205 = vld [vmem:[%s6 + $0x78] sm:$0xff]
    %v206 = vld [vmem:[%s7] sm:$0x1]
    %v208 = vperm.slane %v206, 0
    %210 = vmatpush.msra.mxu0 %v205
    %211 = vmatpush.msra.mxu0 %v204
    %212 = vmatpush.msra.mxu0 %v203
    %213 = vmatpush.msra.mxu0 %v202
    %214 = vmatpush.msra.mxu0 %v201
    %215 = vmatpush.msra.mxu0 %v200
    %216 = vmatpush.msra.mxu0 %v199
    %217 = vmatpush.msra.mxu0 %v198
    %218 = vmatpush.msra.mxu0 %v197
    %219 = vmatpush.msra.mxu0 %v196
    %220 = vmatpush.msra.mxu0 %v195
    %221 = vmatpush.msra.mxu0 %v194
    %222 = vmatpush.msra.mxu0 %v193
    %223 = vmatpush.msra.mxu0 %v192
    %224 = vmatpush.msra.mxu0 %v191
    %225 = vmatpush.msra.mxu0 %v190
    %226 = vmatmul.f32.gmra.mxu0 %v189
    %v227 = vpop.f32.mrf.mxu0
    %v228 = vadd.f32 %v208, %v227
    %229 = vdwg.mxu0
    %v230 = vtanh.pop %v228
    %v231 = vld [vmem:[%s1] sm:$0xff]
    %v232 = vsub.f32 %v231, %v230
    %v233 = vmul.f32 %v232, %v232
    %v234 = vld [vmem:[%s8] sm:$0x1]
    %v236 = vperm.slane %v234, 0
    %v238 = vmul.f32 %v233, %v236
    %vm239 = vcmask 64512
    %v240 = vsel %vm239, %v238, 0.0
    %241 = vadd.xlane.f32.xlu0 %v240
    %v242 = vpop.xlane.xlu0 %241
    %v243 = vmul.f32 %v242, -0.5
    %v244 = vlaneseq
    %v245 = vand.u32 %v244, 127
    %vm246 = vcmp.lt.s32.totalorder %v245, 4
    %vm247 = vcmp.eq.s32.totalorder %v245, 4
    %v248 = vsel %vm247, %v228, %v243
    %v249 = vsel %vm246, %v230, %v248
    %250 = vst.msk [vmem:[#allocation5] sm:$0xff] %vm239, %v249
    // Predicated region
    $region42: #{tpu_custom_call.1} parent=1 // pred_check
      _
    $region43: #{tpu_custom_call.1} parent=1 // pred_check_branch
      %252 = sbr.rel (0) target = $region45
    $region44: #{tpu_custom_call.1} parent=1 // pred_region
      %254 = vsyncadd [#allocation4], 0
      %s256 = sshll.u32 [#allocation5], 4
      %s257 = int_to_ptr.vmem [resolvable:$true] %s256
      %s258 = sshll.u32 %s9, 4
      %s259 = int_to_ptr.hbm [resolvable:$true] %s258
      %261 = dma.vmem_to_hbm [thread:$0]  %s257, 128, %s259, [#allocation4]
    $region45: #{tpu_custom_call.1} parent=1 // pred_fallthru
      _
    // Predicated region
    $region46: #{tpu_custom_call.1} parent=1 // pred_check
      _
    $region47: #{tpu_custom_call.1} parent=1 // pred_check_branch
      %263 = sbr.rel (0) target = $region49
    $region48: #{tpu_custom_call.1} parent=1 // pred_region
      %265 = dma.done [#allocation4], 128
    $region49: #{tpu_custom_call.1} parent=1 // pred_fallthru
      _
    %266 = vsyncpa [#allocation3], 1
    %267 = vsyncpa [#allocation4], 1

</llo_original>
